<compile_context>
chip_gen: v5e
topology: v5e:2x2
jax: 0.10.0
libtpu: 0.0.40
codegen_flags: <defaults>
</compile_context>

<pallas_src>
import functools

import jax
import jax.numpy as jnp
from jax.experimental import pallas as pl
from jax.experimental.pallas import tpu as pltpu


# ---------------------------------------------------------------------------
# Pass 1: partial BN1 statistics of h = W1 @ x + b1 per (batch, length-tile).
# h lives only in VMEM/vregs; one coalesced (Cout, 2) store per grid step.
# ---------------------------------------------------------------------------
def _bn1_stats_kernel(x_ref, w1_ref, b1_ref, st_ref):
    h = jnp.dot(w1_ref[...], x_ref[0], preferred_element_type=jnp.float32) + b1_ref[...]
    st_ref[0] = jnp.concatenate(
        [jnp.sum(h, axis=-1, keepdims=True),
         jnp.sum(h * h, axis=-1, keepdims=True)], axis=-1)


# ---------------------------------------------------------------------------
# Pass 2: per batch — conv1 + BN1(scale/shift) + ReLU, then a scatter-free,
# phase-decomposed ConvTranspose1d plus partial BN2 statistics.
# y_ref is the phase-compact slab: y_ref[0, p, :, m] == y[:, m*stride + p].
# ---------------------------------------------------------------------------
def _convt_kernel(x_ref, w1_ref, b1_ref, sc1_ref, sh1_ref, w2_ref, b2_ref,
                  y_ref, st_ref, *, ksize, stride, pad, l_in, l_out, m_max):
    c_out = w1_ref.shape[0]
    w = max(l_in, m_max)                 # common working width for roll + mask

    # conv1 (pointwise) + BN1 + ReLU; channels on sublanes, length on lanes.
    h = jnp.dot(w1_ref[...], x_ref[0], preferred_element_type=jnp.float32) + b1_ref[...]
    hn = jnp.maximum(h * sc1_ref[...] + sh1_ref[...], 0.0)          # (Cout, L)
    if w > l_in:
        hn = jnp.concatenate(
            [hn, jnp.zeros((c_out, w - l_in), jnp.float32)], axis=-1)

    # All K taps in a single MXU call: (K*Cout, Cout) @ (Cout, W).
    zall = jnp.dot(w2_ref[...], hn, preferred_element_type=jnp.float32)

    iota = jax.lax.broadcasted_iota(jnp.int32, (c_out, w), 1)
    b2 = b2_ref[...]
    s1 = jnp.zeros((c_out, 1), jnp.float32)
    s2 = jnp.zeros((c_out, 1), jnp.float32)
    for p in range(stride):                                          # static, tiny
        m_p = (l_out - p + stride - 1) // stride                     # valid slots in phase p
        acc = jnp.zeros((c_out, w), jnp.float32)
        for k in range(ksize):                                       # static, tiny
            d = k - pad
            if d % stride != p:
                continue                                             # tap belongs to another phase
            q = (d - p) // stride                                    # shift along the phase axis
            m_lo = max(0, q)
            m_hi = min(m_p, l_in + q)
            if m_hi <= m_lo:
                continue
            zk = zall[k * c_out:(k + 1) * c_out]                     # free sublane-aligned view
            shift = q % w
            rolled = pltpu.roll(zk, shift=shift, axis=1) if shift else zk
            if m_lo == 0 and m_hi == w:
                acc = acc + rolled
            else:
                acc = acc + jnp.where((iota >= m_lo) & (iota < m_hi), rolled, 0.0)

        # bias on valid slots only; the padded tail stays zero so BN2 stats are clean.
        y_p = jnp.where(iota < m_p, acc + b2, 0.0)
        y_ref[0, p] = y_p[:, :m_max] if w > m_max else y_p
        s1 = s1 + jnp.sum(y_p, axis=-1, keepdims=True)
        s2 = s2 + jnp.sum(y_p * y_p, axis=-1, keepdims=True)

    st_ref[0] = jnp.concatenate([s1, s2], axis=-1)                   # one coalesced store


def _pick_l_tile(l, cap=2048):
    """Largest tile that divides l: the full length if it is small enough, else the
    biggest multiple-of-128 divisor not exceeding `cap`."""
    if l <= cap:
        return l
    for t in range(cap - cap % 128, 127, -128):
        if l % t == 0:
            return t
    return l  # no aligned divisor; take the whole length


def make_params(key, in_channels, out_channels, kernel_size):
    k1, k2, k3, k4 = jax.random.split(key, 4)
    return dict(
        w1=jax.random.normal(k1, (out_channels, in_channels, 1), jnp.float32) * 0.1,
        b1=jax.random.normal(k2, (out_channels,), jnp.float32) * 0.1,
        w2=jax.random.normal(k3, (out_channels, out_channels, kernel_size), jnp.float32) * 0.1,
        b2=jax.random.normal(k4, (out_channels,), jnp.float32) * 0.1,
        g1=jnp.ones((out_channels,), jnp.float32),
        be1=jnp.zeros((out_channels,), jnp.float32),
        g2=jnp.ones((out_channels,), jnp.float32),
        be2=jnp.zeros((out_channels,), jnp.float32),
    )


def trcnn_forward(x1, x2, params, *, kernel_size, stride, eps=1e-5):
    n, c1, l1 = x1.shape
    _, c2, l2 = x2.shape
    c_in = c1 + c2
    c_out = params["w1"].shape[0]
    pad = stride // 2
    l_out = (l2 - 1) * stride - 2 * pad + kernel_size
    m_max = -(-l_out // stride)                                      # ceil(l_out / stride)

    # --- glue: pad x1 along length, concat channels; stays NCL (length on lanes) ---
    diff = l2 - l1
    x1p = jnp.pad(x1, ((0, 0), (0, 0), (diff // 2, diff - diff // 2)))
    x = jnp.concatenate([x1p, x2], axis=1).astype(jnp.float32)       # (N, Cin, L)

    # --- glue: parameter rearrangement (channel vectors broadcast over lanes) ---
    w1 = params["w1"][:, :, 0]                                       # (Cout, Cin)
    b1 = params["b1"].reshape(c_out, 1)
    # (K, out, in) stacked along sublanes -> single fused tap matmul in pass 2.
    w2all = jnp.transpose(params["w2"], (2, 1, 0)).reshape(kernel_size * c_out, c_out)
    b2 = params["b2"].reshape(c_out, 1)

    # ---- pass 1: BN1 batch statistics, gridded over (batch, large L-tiles) ----
    lt = _pick_l_tile(l2)
    n_t = l2 // lt
    stats1 = pl.pallas_call(
        _bn1_stats_kernel,
        out_shape=jax.ShapeDtypeStruct((n * n_t, c_out, 2), jnp.float32),
        grid=(n, n_t),
        in_specs=[
            pl.BlockSpec((1, c_in, lt), lambda i, t: (i, 0, t)),
            pl.BlockSpec((c_out, c_in), lambda i, t: (0, 0)),
            pl.BlockSpec((c_out, 1), lambda i, t: (0, 0)),
        ],
        out_specs=pl.BlockSpec((1, c_out, 2), lambda i, t: (i * n_t + t, 0, 0)),
        compiler_params=pltpu.CompilerParams(
            dimension_semantics=("parallel", "parallel")),
    )(x, w1, b1)

    cnt1 = float(n * l2)
    mean1 = jnp.sum(stats1[:, :, 0], axis=0) / cnt1
    var1 = jnp.maximum(jnp.sum(stats1[:, :, 1], axis=0) / cnt1 - mean1 * mean1, 0.0)
    inv1 = jax.lax.rsqrt(var1 + eps)
    scale1 = (params["g1"] * inv1).reshape(c_out, 1)
    shift1 = (params["be1"] - mean1 * params["g1"] * inv1).reshape(c_out, 1)

    # ---- pass 2: fused conv1+BN1+ReLU + phase-decomposed ConvTranspose1d + BN2 stats ----
    kernel2 = functools.partial(
        _convt_kernel, ksize=kernel_size, stride=stride, pad=pad,
        l_in=l2, l_out=l_out, m_max=m_max)
    y_phase, stats2 = pl.pallas_call(
        kernel2,
        out_shape=(jax.ShapeDtypeStruct((n, stride, c_out, m_max), jnp.float32),
                   jax.ShapeDtypeStruct((n, c_out, 2), jnp.float32)),
        grid=(n,),
        in_specs=[
            pl.BlockSpec((1, c_in, l2), lambda i: (i, 0, 0)),
            pl.BlockSpec((c_out, c_in), lambda i: (0, 0)),
            pl.BlockSpec((c_out, 1), lambda i: (0, 0)),
            pl.BlockSpec((c_out, 1), lambda i: (0, 0)),
            pl.BlockSpec((c_out, 1), lambda i: (0, 0)),
            pl.BlockSpec((kernel_size * c_out, c_out), lambda i: (0, 0)),
            pl.BlockSpec((c_out, 1), lambda i: (0, 0)),
        ],
        out_specs=(pl.BlockSpec((1, stride, c_out, m_max), lambda i: (i, 0, 0, 0)),
                   pl.BlockSpec((1, c_out, 2), lambda i: (i, 0, 0))),
        compiler_params=pltpu.CompilerParams(dimension_semantics=("parallel",)),
    )(x, w1, b1, scale1, shift1, w2all, b2)

    cnt2 = float(n * l_out)
    mean2 = jnp.sum(stats2[:, :, 0], axis=0) / cnt2
    var2 = jnp.maximum(jnp.sum(stats2[:, :, 1], axis=0) / cnt2 - mean2 * mean2, 0.0)
    inv2 = jax.lax.rsqrt(var2 + eps)
    scale2 = (params["g2"] * inv2).reshape(1, 1, c_out, 1)
    shift2 = (params["be2"] - mean2 * params["g2"] * inv2).reshape(1, 1, c_out, 1)

    # ---- epilogue (pure XLA, fuses with the transpose): BN2 affine + ReLU +
    # phase->length interleave: out[n, c, m*stride + p] = y[n, p, c, m]. Positions
    # >= l_out (the zeroed phase tails) are sliced off.
    y = jnp.maximum(y_phase * scale2 + shift2, 0.0)
    out = jnp.transpose(y, (0, 2, 3, 1)).reshape(n, c_out, m_max * stride)
    return out[:, :, :l_out]


def trcnn_reference(x1, x2, params, *, kernel_size, stride, eps=1e-5):
    """Pure-JAX reference mirroring the PyTorch forward (train-mode BatchNorm)."""
    diff = x2.shape[2] - x1.shape[2]
    x1p = jnp.pad(x1, ((0, 0), (0, 0), (diff // 2, diff - diff // 2)))
    x = jnp.concatenate([x1p, x2], axis=1)                           # (N, Cin, L)
    h = jnp.einsum("ncl,oc->nol", x, params["w1"][:, :, 0]) + params["b1"][None, :, None]
    m = h.mean(axis=(0, 2), keepdims=True)
    v = jnp.square(h - m).mean(axis=(0, 2), keepdims=True)
    h = (h - m) / jnp.sqrt(v + eps)
    h = h * params["g1"][None, :, None] + params["be1"][None, :, None]
    h = jnp.maximum(h, 0.0)

    n, c_out, l_in = h.shape
    pad = stride // 2
    l_out = (l_in - 1) * stride - 2 * pad + kernel_size
    y = jnp.zeros((n, c_out, l_out), jnp.float32)
    for k in range(kernel_size):
        contrib = jnp.einsum("ncl,co->nol", h, params["w2"][:, :, k])
        pos = jnp.arange(l_in) * stride - pad + k
        valid = (pos >= 0) & (pos < l_out)
        contrib = jnp.where(valid[None, None, :], contrib, 0.0)
        pos = jnp.clip(pos, 0, l_out - 1)
        y = y.at[:, :, pos].add(contrib)
    y = y + params["b2"][None, :, None]
    m2 = y.mean(axis=(0, 2), keepdims=True)
    v2 = jnp.square(y - m2).mean(axis=(0, 2), keepdims=True)
    y = (y - m2) / jnp.sqrt(v2 + eps)
    y = y * params["g2"][None, :, None] + params["be2"][None, :, None]
    return jnp.maximum(y, 0.0)


if __name__ == "__main__":
    key = jax.random.PRNGKey(0)
    kx1, kx2, kp = jax.random.split(key, 3)

    N, C1, C2 = 2, 2, 2
    L1, L2 = 250, 256                       # lane-dense lengths
    C_IN, C_OUT = C1 + C2, 8
    KSIZE, STRIDE = 4, 2

    x1 = jax.random.normal(kx1, (N, C1, L1), jnp.float32)
    x2 = jax.random.normal(kx2, (N, C2, L2), jnp.float32)
    params = make_params(kp, C_IN, C_OUT, KSIZE)

    out = trcnn_forward(x1, x2, params, kernel_size=KSIZE, stride=STRIDE)
    out = jax.block_until_ready(out)

    ref = trcnn_reference(x1, x2, params, kernel_size=KSIZE, stride=STRIDE)
    assert out.shape == ref.shape, (out.shape, ref.shape)
    max_err = float(jnp.max(jnp.abs(out - ref)))
    assert jnp.allclose(out, ref, atol=1e-3, rtol=1e-3), max_err

    print("KERNEL_OK")
</pallas_src>

<mosaic_0001>
module attributes {stable_mosaic.version = 11 : i64} {
  func.func @_bn1_stats_kernel(%arg0: i32, %arg1: i32, %arg2: memref<1x4x256xf32, #tpu.memory_space<vmem>>, %arg3: memref<8x4xf32, #tpu.memory_space<vmem>>, %arg4: memref<8x1xf32, #tpu.memory_space<vmem>>, %arg5: memref<1x8x2xf32, #tpu.memory_space<vmem>>) attributes {dimension_semantics = [#tpu.dimension_semantics<parallel>, #tpu.dimension_semantics<parallel>], iteration_bounds = array<i64: 2, 1>, scalar_prefetch = 0 : i64, scratch_operands = 0 : i64, tpu.core_type = #tpu.core_type<tc>, window_params = [{transform_indices = @transform_0, window_bounds = array<i64: 1, 4, 256>}, {pipeline_mode = #tpu.pipeline_mode<synchronous>, transform_indices = @transform_1, window_bounds = array<i64: 8, 4>}, {pipeline_mode = #tpu.pipeline_mode<synchronous>, transform_indices = @transform_2, window_bounds = array<i64: 8, 1>}, {transform_indices = @transform_3, window_bounds = array<i64: 1, 8, 2>}]} {
    %c0 = arith.constant 0 : index
    %c0_0 = arith.constant 0 : index
    %0 = vector.load %arg3[%c0, %c0_0] : memref<8x4xf32, #tpu.memory_space<vmem>>, vector<8x4xf32>
    %c0_1 = arith.constant 0 : index
    %c0_2 = arith.constant 0 : index
    %c0_3 = arith.constant 0 : index
    %1 = vector.load %arg2[%c0_1, %c0_2, %c0_3] : memref<1x4x256xf32, #tpu.memory_space<vmem>>, vector<1x4x256xf32>
    %2 = vector.shape_cast %1 : vector<1x4x256xf32> to vector<4x256xf32>
    %cst = arith.constant dense<0.000000e+00> : vector<8x256xf32>
    %3 = tpu.matmul %0, %2, %cst {dimension_numbers = #tpu.dot_dimension_numbers<[1], [0], [0], [1], [0, 0, 1, 1], [], []>} : vector<8x4xf32>, vector<4x256xf32>, vector<8x256xf32> -> vector<8x256xf32>
    %c0_4 = arith.constant 0 : index
    %c0_5 = arith.constant 0 : index
    %4 = vector.load %arg4[%c0_4, %c0_5] : memref<8x1xf32, #tpu.memory_space<vmem>>, vector<8x1xf32>
    %5 = vector.broadcast %4 : vector<8x1xf32> to vector<8x256xf32>
    %6 = arith.addf %3, %5 : vector<8x256xf32>
    %cst_6 = arith.constant dense<0.000000e+00> : vector<8xf32>
    %7 = vector.multi_reduction <add>, %6, %cst_6 [1] : vector<8x256xf32> to vector<8xf32>
    %8 = vector.shape_cast %7 : vector<8xf32> to vector<8x1xf32>
    %9 = arith.mulf %6, %6 : vector<8x256xf32>
    %cst_7 = arith.constant dense<0.000000e+00> : vector<8xf32>
    %10 = vector.multi_reduction <add>, %9, %cst_7 [1] : vector<8x256xf32> to vector<8xf32>
    %11 = vector.shape_cast %10 : vector<8xf32> to vector<8x1xf32>
    %12 = tpu.concatenate %8, %11 in 1 : vector<8x1xf32>, vector<8x1xf32> -> vector<8x2xf32>
    %c0_8 = arith.constant 0 : index
    %c0_9 = arith.constant 0 : index
    %c0_10 = arith.constant 0 : index
    %13 = vector.load %arg5[%c0_8, %c0_9, %c0_10] : memref<1x8x2xf32, #tpu.memory_space<vmem>>, vector<1x8x2xf32>
    %14 = vector.shape_cast %13 : vector<1x8x2xf32> to vector<8x2xf32>
    %15 = vector.shape_cast %12 : vector<8x2xf32> to vector<1x8x2xf32>
    tpu.vector_store %arg5[%c0_8, %c0_9, %c0_10], %15 {strides = array<i32>} : memref<1x8x2xf32, #tpu.memory_space<vmem>>, vector<1x8x2xf32>,
    return
  }
  func.func @transform_0(%arg0: i32, %arg1: i32) -> (i32, i32, i32) {
    %c0_i32 = arith.constant 0 : i32
    %c0_i32_0 = arith.constant 0 : i32
    return %arg0, %c0_i32, %arg1 : i32, i32, i32
  }
  func.func @transform_1(%arg0: i32, %arg1: i32) -> (i32, i32) {
    %c0_i32 = arith.constant 0 : i32
    %c0_i32_0 = arith.constant 0 : i32
    %c0_i32_1 = arith.constant 0 : i32
    return %c0_i32, %c0_i32_0 : i32, i32
  }
  func.func @transform_2(%arg0: i32, %arg1: i32) -> (i32, i32) {
    %c0_i32 = arith.constant 0 : i32
    %c0_i32_0 = arith.constant 0 : i32
    %c0_i32_1 = arith.constant 0 : i32
    return %c0_i32, %c0_i32_0 : i32, i32
  }
  func.func @transform_3(%arg0: i32, %arg1: i32) -> (i32, i32, i32) {
    %c1_i32 = arith.constant 1 : i32
    %0 = arith.muli %arg0, %c1_i32 : i32
    %1 = arith.addi %0, %arg1 : i32
    %c0_i32 = arith.constant 0 : i32
    %c0_i32_0 = arith.constant 0 : i32
    %c0_i32_1 = arith.constant 0 : i32
    return %1, %c0_i32, %c0_i32_0 : i32, i32, i32
  }
}

</mosaic_0001>

<llo_original>
// kernel: tpu_custom_call.1
$region0: #{tpu_custom_call.1}
  #allocation0 [shape = 'u32[]', space=smem, size = 0x4, offset = 0x4, fixed_abs, tag = 'smem constant byte address 0x4 - core index']
  #allocation1 [shape = 'u32[72,128]{1,0:T(1,128)}', space=vmem, size = 0x9000, scoped, tag = 'internal scratch']
  %s0 = inlined_call_operand.vmem [shape: f32[2,4,256], index: 0, kind: input, shape index: {}]
  %s1 = inlined_call_operand.vmem [shape: f32[8,4], index: 1, kind: input, shape index: {}]
  %s2 = inlined_call_operand.vmem [shape: f32[8,1], index: 2, kind: input, shape index: {}]
  %s3 = inlined_call_operand.vmem [shape: f32[2,8,2], index: 3, kind: output, shape index: {}]
  %s4 = sld [smem:[#allocation0]]
  $region45: #{tpu_custom_call.1} parent=0
    _
  %s6 = ssub.s32 1, %s4
  %s7 = scalar_select 0, %s6, %s4
  loop: start=0, step=1, limit=4
  $region2: #{tpu_custom_call.1} parent=0 // loop_pre_header
    _
  $region3: #{tpu_custom_call.1} parent=0 // loop_header
    %s9 = sphi 0, %s13
    %p10 = scmp.ge.s32.totalorder %s9, 4
    %s16 = sphi 0, %s28
    %s17 = sphi 0, %s24
    %s18 = sphi 0, %s16
    %s19 = sphi 0, %s17
    %s20 = sphi 0, %s18
    %s21 = sphi 0, %s19
    %s33 = sphi 0, %s35
    %s36 = sphi 0, %s33
    %s37 = sphi 0, %s36
    %s53 = sphi 0, %s37
    %s57 = sphi 0, %s57
    %s59 = sphi 0, %s57
    %s60 = sphi 0, %s59
    %s74 = sphi 0, %s60
    %s78 = sphi 0, %s78
    %s80 = sphi 0, %s78
    %s81 = sphi 0, %s80
    %s95 = sphi 0, %s81
    %s103 = sphi 0, %s105
    %s106 = sphi 0, %s103
    %s107 = sphi 0, %s106
    %s123 = sphi 0, %s107
  $region4: #{tpu_custom_call.1} parent=0 // loop_header_branch
    %12 = sbr.rel (%p10) target = $region8
  $region5: #{tpu_custom_call.1} parent=0 // loop_body
    %s14 = ssub.s32 %s9, 1
    %s15 = ssub.s32 %s9, 2
    %s22 = sadd.s32 1, %s17
    %p23 = scmp.ge.s32.totalorder %s22, 1
    %s24 = scalar_select %p23, 0, %s22
    %s25 = sadd.s32 1, %s16
    %s26 = scalar_select %p23, %s25, %s16
    %p27 = scmp.ge.s32.totalorder %s26, 2
    %s28 = scalar_select %p27, 0, %s26
    %s29 = ssub.s32 %s16, %s28
    %s30 = ssub.s32 %s17, %s24
    %s31 = sor.u32 %s29, %s30
    %p32 = scmp.eq.s32.totalorder %s31, 0
    %s34 = sadd.s32 %s33, 1
    %s35 = scalar_select %p32, %s33, %s34
    %p38 = pneg %p32
    %p39 = scmp.eq.s32.totalorder %s9, 1
    %p40 = por %p38, %p39
    %p41 = scmp.ne.s32.totalorder %s33, %s36
    %p42 = scmp.eq.s32.totalorder %s9, 0
    %p43 = por %p41, %p42
    %p44 = scmp.ne.s32.totalorder %s33, %s36
    %p45 = scmp.eq.s32.totalorder %s14, 1
    %p46 = por %p44, %p45
    %p47 = scmp.ne.s32.totalorder %s36, %s37
    %p48 = scmp.eq.s32.totalorder %s14, 0
    %p49 = por %p47, %p48
    %p50 = scmp.ne.s32.totalorder %s36, %s37
    %p51 = scmp.eq.s32.totalorder %s15, 1
    %p52 = por %p50, %p51
    %p54 = scmp.ne.s32.totalorder %s37, %s53
    %p55 = scmp.eq.s32.totalorder %s15, 0
    %p56 = por %p54, %p55
    %s58 = sadd.s32 %s57, 1
    %p61 = scmp.eq.s32.totalorder %s9, 1
    %p62 = scmp.ne.s32.totalorder %s57, %s59
    %p63 = scmp.eq.s32.totalorder %s9, 0
    %p64 = por %p62, %p63
    %p65 = scmp.ne.s32.totalorder %s57, %s59
    %p66 = scmp.eq.s32.totalorder %s14, 1
    %p67 = por %p65, %p66
    %p68 = scmp.ne.s32.totalorder %s59, %s60
    %p69 = scmp.eq.s32.totalorder %s14, 0
    %p70 = por %p68, %p69
    %p71 = scmp.ne.s32.totalorder %s59, %s60
    %p72 = scmp.eq.s32.totalorder %s15, 1
    %p73 = por %p71, %p72
    %p75 = scmp.ne.s32.totalorder %s60, %s74
    %p76 = scmp.eq.s32.totalorder %s15, 0
    %p77 = por %p75, %p76
    %s79 = sadd.s32 %s78, 1
    %p82 = scmp.eq.s32.totalorder %s9, 1
    %p83 = scmp.ne.s32.totalorder %s78, %s80
    %p84 = scmp.eq.s32.totalorder %s9, 0
    %p85 = por %p83, %p84
    %p86 = scmp.ne.s32.totalorder %s78, %s80
    %p87 = scmp.eq.s32.totalorder %s14, 1
    %p88 = por %p86, %p87
    %p89 = scmp.ne.s32.totalorder %s80, %s81
    %p90 = scmp.eq.s32.totalorder %s14, 0
    %p91 = por %p89, %p90
    %p92 = scmp.ne.s32.totalorder %s80, %s81
    %p93 = scmp.eq.s32.totalorder %s15, 1
    %p94 = por %p92, %p93
    %p96 = scmp.ne.s32.totalorder %s81, %s95
    %p97 = scmp.eq.s32.totalorder %s15, 0
    %p98 = por %p96, %p97
    %s99 = sadd.s32 %s16, %s17
    %s100 = sadd.s32 %s28, %s24
    %s101 = ssub.s32 %s99, %s100
    %p102 = scmp.eq.s32.totalorder %s101, 0
    %s104 = sadd.s32 %s103, 1
    %s105 = scalar_select %p102, %s103, %s104
    %p108 = pneg %p102
    %p109 = scmp.eq.s32.totalorder %s9, 1
    %p110 = por %p108, %p109
    %p111 = scmp.ne.s32.totalorder %s103, %s106
    %p112 = scmp.eq.s32.totalorder %s9, 0
    %p113 = por %p111, %p112
    %p114 = scmp.ne.s32.totalorder %s103, %s106
    %p115 = scmp.eq.s32.totalorder %s14, 1
    %p116 = por %p114, %p115
    %p117 = scmp.ne.s32.totalorder %s106, %s107
    %p118 = scmp.eq.s32.totalorder %s14, 0
    %p119 = por %p117, %p118
    %p120 = scmp.ne.s32.totalorder %s106, %s107
    %p121 = scmp.eq.s32.totalorder %s15, 1
    %p122 = por %p120, %p121
    %p124 = scmp.ne.s32.totalorder %s107, %s123
    %p125 = scmp.eq.s32.totalorder %s15, 0
    %p126 = por %p124, %p125
    %p127 = scmp.le.s32.totalorder 1, %s9
    %p128 = scmp.lt.s32.totalorder %s9, 3
    %p129 = pnand %p127, %p128
    %p130 = pneg %p129
    // Predicated region
    $region9: #{tpu_custom_call.1} parent=5 // pred_check
      _
    $region10: #{tpu_custom_call.1} parent=5 // pred_check_branch
      %132 = sbr.rel (%p129) target = $region12
    $region11: #{tpu_custom_call.1} parent=5 // pred_region
      %s133 = ssub.s32 %s9, 1
      // Predicated region
      $region13: #{tpu_custom_call.1} parent=11 // pred_check
        %p134 = pneg %p70
      $region14: #{tpu_custom_call.1} parent=11 // pred_check_branch
        %136 = sbr.rel (%p134) target = $region16
      $region15: #{tpu_custom_call.1} parent=11 // pred_region
        _
      $region16: #{tpu_custom_call.1} parent=11 // pred_fallthru
        _
      // Predicated region
      $region17: #{tpu_custom_call.1} parent=11 // pred_check
        %p137 = pneg %p91
      $region18: #{tpu_custom_call.1} parent=11 // pred_check_branch
        %139 = sbr.rel (%p137) target = $region20
      $region19: #{tpu_custom_call.1} parent=11 // pred_region
        _
      $region20: #{tpu_custom_call.1} parent=11 // pred_fallthru
        _
    $region12: #{tpu_custom_call.1} parent=5 // pred_fallthru
      _
    %p140 = scmp.lt.s32.totalorder %s9, 2
    // Predicated region
    $region21: #{tpu_custom_call.1} parent=5 // pred_check
      %p141 = pneg %p140
    $region22: #{tpu_custom_call.1} parent=5 // pred_check_branch
      %143 = sbr.rel (%p141) target = $region24
    $region23: #{tpu_custom_call.1} parent=5 // pred_region
      // Predicated region
      $region25: #{tpu_custom_call.1} parent=23 // pred_check
        %p144 = pneg %p43
      $region26: #{tpu_custom_call.1} parent=23 // pred_check_branch
        %146 = sbr.rel (%p144) target = $region28
      $region27: #{tpu_custom_call.1} parent=23 // pred_region
        %s147 = smul.u32 2, %s17
        %p148 = scmp.lt.s32.totalorder %s16, 1
        %s149 = scalar_select %p148, %s16, 1
        %p150 = scmp.lt.s32.totalorder %s147, 1
        %s151 = scalar_select %p150, %s147, 1
        %s152 = smul.addr %s149, 2
        %s153 = sadd.s32 %s151, %s152
        %s154 = smul.addr %s153, 4
        %s155 = scalar_lea.vmem %s0, %s154
        %s156 = smul.u32 2, %s17
      $region28: #{tpu_custom_call.1} parent=23 // pred_fallthru
        _
    $region24: #{tpu_custom_call.1} parent=5 // pred_fallthru
      _
    %p157 = scmp.le.s32.totalorder 1, %s9
    %p158 = scmp.lt.s32.totalorder %s9, 3
    %p159 = pnand %p157, %p158
    %p160 = pneg %p159
    // Predicated region
    $region29: #{tpu_custom_call.1} parent=5 // pred_check
      _
    $region30: #{tpu_custom_call.1} parent=5 // pred_check_branch
      %162 = sbr.rel (%p159) target = $region32
    $region31: #{tpu_custom_call.1} parent=5 // pred_region
      %s163 = ssub.s32 %s9, 1
      %s164 = smul.u32 2, %s19
      %p165 = scmp.lt.s32.totalorder %s18, 1
      %s166 = scalar_select %p165, %s18, 1
      %p167 = scmp.lt.s32.totalorder %s164, 1
      %s168 = scalar_select %p167, %s164, 1
      %s169 = smul.addr %s166, 2
      %s170 = sadd.s32 %s168, %s169
      %s171 = smul.addr %s170, 4
      %s172 = scalar_lea.vmem %s0, %s171
      %p173 = pneg %p49
      %p174 = pneg %p46
      %p175 = pneg %p70
      %p176 = pneg %p67
      %p177 = pneg %p91
      %p178 = pneg %p88
      %p179 = pneg %p119
      %p180 = pneg %p116
      %s181 = sadd.s32 %s18, %s19
      %p182 = scmp.lt.s32.totalorder %s181, 1
      %s183 = scalar_select %p182, %s181, 1
      %s184 = smul.addr %s183, 8
      %s185 = scalar_lea.vmem %s3, %s184
      %s186 = smul.u32 2, %s19
      %p187 = scmp.lt.s32.totalorder %s18, 1
      %s188 = scalar_select %p187, %s18, 1
      %p189 = scmp.lt.s32.totalorder %s186, 1
      %s190 = scalar_select %p189, %s186, 1
      %s191 = smul.addr %s188, 2
      %s192 = sadd.s32 %s190, %s191
      %s193 = smul.addr %s192, 4
      %s194 = scalar_lea.vmem %s0, %s193
      %s195 = smul.u32 2, %s19
      %s196 = sadd.s32 %s18, %s19
      %p197 = scmp.lt.s32.totalorder %s196, 1
      %s198 = scalar_select %p197, %s196, 1
      %s199 = smul.addr %s198, 8
      %s200 = scalar_lea.vmem %s3, %s199
      %s201 = sadd.s32 %s18, %s19
      %v202 = vld [vmem:[%s1] sm:$0xff]
      %v203 = vld [vmem:[%s194] sm:$0xff]
      %v204 = vld [vmem:[%s2] sm:$0xff]
      %206 = vset.pattern.permute.xlu0 0
      %207 = vperm.xlu0 %206, %v204
      %v208 = vpop.permute.xlu0 %207
      %211 = vst [vmem:[#allocation1] ss:$2 sm:$0xff] %v203
      %v212 = vld.sshfl [vmem:[#allocation1] sm:$0xff pattern:$0x75316420]
      %v213 = vld.sshfl [vmem:[#allocation1 + $0x8] sm:$0xff pattern:$0x75316420]
      %vm214 = vcmask 31744
      %v216 = vsel %vm214, %v202, 0
      %vm218 = vcmask 1043456
      %v219 = vsel %vm218, %v212, 0
      %v221 = vsel %vm218, %v213, 0
      %223 = vmatpush.msra.mxu0 0.0
      %224 = vmatpush.msra.mxu0 0.0
      %225 = vmatpush.msra.mxu0 0.0
      %226 = vmatpush.msra.mxu0 0.0
      %227 = vmatpush.msra.mxu0 0.0
      %228 = vmatpush.msra.mxu0 0.0
      %229 = vmatpush.msra.mxu0 0.0
      %230 = vmatpush.msra.mxu0 0.0
      %231 = vmatpush.msra.mxu0 0.0
      %232 = vmatpush.msra.mxu0 0.0
      %233 = vmatpush.msra.mxu0 0.0
      %234 = vmatpush.msra.mxu0 0.0
      %235 = vmatpush.msra.mxu0 0.0
      %236 = vmatpush.msra.mxu0 0.0
      %237 = vmatpush.msra.mxu0 0.0
      %238 = vmatpush.msra.mxu0 %v219
      %239 = vmatmul.f32.gmra.mxu0 %v216
      %v240 = vpop.f32.mrf.mxu0
      %v241 = vadd.f32 %v208, %v240
      %242 = vdwg.mxu0
      %243 = vmatpush.msra.mxu0 0.0
      %244 = vmatpush.msra.mxu0 0.0
      %245 = vmatpush.msra.mxu0 0.0
      %246 = vmatpush.msra.mxu0 0.0
      %247 = vmatpush.msra.mxu0 0.0
      %248 = vmatpush.msra.mxu0 0.0
      %249 = vmatpush.msra.mxu0 0.0
      %250 = vmatpush.msra.mxu0 0.0
      %251 = vmatpush.msra.mxu0 0.0
      %252 = vmatpush.msra.mxu0 0.0
      %253 = vmatpush.msra.mxu0 0.0
      %254 = vmatpush.msra.mxu0 0.0
      %255 = vmatpush.msra.mxu0 0.0
      %256 = vmatpush.msra.mxu0 0.0
      %257 = vmatpush.msra.mxu0 0.0
      %258 = vmatpush.msra.mxu0 %v221
      %259 = vmatmul.f32.gmra.mxu0 %v216
      %v260 = vpop.f32.mrf.mxu0
      %v261 = vadd.f32 %v208, %v260
      %262 = vdwg.mxu0
      %v263 = vadd.f32 %v241, %v261
      %264 = vadd.xlane.f32.xlu0 %v263
      %v265 = vpop.xlane.xlu0 %264
      %v266 = vmul.f32 %v241, %v241
      %v267 = vmul.f32 %v261, %v261
      %v268 = vadd.f32 %v266, %v267
      %269 = vadd.xlane.f32.xlu0 %v268
      %v270 = vpop.xlane.xlu0 %269
      %vm271 = vcmask 7168
      %v272 = vsel %vm271, %v265, %v270
      %vm273 = vcmask 15360
      %274 = vst.msk [vmem:[%s200] sm:$0xff] %vm273, %v272
      %s275 = sadd.s32 %s18, %s19
      %p276 = scmp.lt.s32.totalorder %s275, 1
      %s277 = scalar_select %p276, %s275, 1
      %s278 = smul.addr %s277, 8
      %s279 = scalar_lea.vmem %s3, %s278
      // Predicated region
      $region33: #{tpu_custom_call.1} parent=31 // pred_check
        %p280 = pneg %p116
      $region34: #{tpu_custom_call.1} parent=31 // pred_check_branch
        %282 = sbr.rel (%p280) target = $region36
      $region35: #{tpu_custom_call.1} parent=31 // pred_region
        %s283 = sadd.s32 %s18, %s19
      $region36: #{tpu_custom_call.1} parent=31 // pred_fallthru
        _
    $region32: #{tpu_custom_call.1} parent=5 // pred_fallthru
      _
    %p284 = scmp.le.s32.totalorder 2, %s9
    // Predicated region
    $region37: #{tpu_custom_call.1} parent=5 // pred_check
      %p285 = pneg %p284
    $region38: #{tpu_custom_call.1} parent=5 // pred_check_branch
      %287 = sbr.rel (%p285) target = $region40
    $region39: #{tpu_custom_call.1} parent=5 // pred_region
      %s288 = ssub.s32 %s9, 2
      // Predicated region
      $region41: #{tpu_custom_call.1} parent=39 // pred_check
        %p289 = pneg %p122
      $region42: #{tpu_custom_call.1} parent=39 // pred_check_branch
        %291 = sbr.rel (%p289) target = $region44
      $region43: #{tpu_custom_call.1} parent=39 // pred_region
        %s292 = sadd.s32 %s20, %s21
        %p293 = scmp.lt.s32.totalorder %s292, 1
        %s294 = scalar_select %p293, %s292, 1
        %s295 = smul.addr %s294, 8
        %s296 = scalar_lea.vmem %s3, %s295
      $region44: #{tpu_custom_call.1} parent=39 // pred_fallthru
        _
    $region40: #{tpu_custom_call.1} parent=5 // pred_fallthru
      _
  $region6: #{tpu_custom_call.1} parent=0 // loop_footer
    %s13 = sadd.s32 1, %s9
  $region7: #{tpu_custom_call.1} parent=0 // loop_footer_branch
    %8 = sbr.rel target = $region3
  $region8: #{tpu_custom_call.1} parent=0 // loop_exit
    _

</llo_original>
